<compile_context>
chip_gen: v6e
topology: v6e:2x2x1
jax: 0.10.0
libtpu: 0.0.40
codegen_flags: <defaults>
</compile_context>

<pallas_src>
import jax
import jax.numpy as jnp
from jax.experimental import pallas as pl
from jax.experimental.pallas import tpu as pltpu


def conv_model_forward(x, weight, bias):
    """x: [N, C, H, W] f32; weight: [OC, C, KH, KW]; bias: [OC].
    Returns [N, OC, OH, OW] = 2 * (conv2d(x, weight, stride=1, VALID) + bias)."""
    N, C, H, W = x.shape
    OC, _, KH, KW = weight.shape
    OH, OW = H - KH + 1, W - KW + 1

    LANE = 128
    HW = H * W
    K = C * KH * KW
    # Output lanes per image (always a multiple of 128 -> dense vst).
    S = ((HW + LANE - 1) // LANE) * LANE
    # In-kernel padded image width: max window offset is (KH-1)*W + (KW-1),
    # assumed < 128 at these shapes; one extra 128-lane halo covers it.
    assert (KH - 1) * W + (KW - 1) < LANE, "kernel window offset exceeds 128-lane halo"
    S_IN = S + LANE

    # Free reshape (contiguous) - no HBM copy.
    x_flat = x.reshape(N, C, HW)

    # Fold the `* 2` into weight/bias (exact: power-of-two scale) and lay the
    # weights out tap-major so row index = (kh*KW + kw)*C + c matches the RHS.
    w_prep = jnp.transpose(weight * 2.0, (0, 2, 3, 1)).reshape(OC, K)
    b_prep = (bias * 2.0).reshape(OC, 1)

    def kernel(x_ref, w_ref, b_ref, o_ref, xpad_ref, rhs_ref):
        # x_ref   : [1, C, HW]   one flattened image
        # w_ref   : [OC, K]      VMEM-resident (constant index_map)
        # b_ref   : [OC, 1]      VMEM-resident
        # o_ref   : [1, OC, S]   lane-dense output block
        # xpad_ref: [C, S_IN]    image + zero halo (scratch)
        # rhs_ref : [K, S]       stacked im2col RHS (scratch)

        # Copy image into the halo'd scratch; zero the halo so garbage lanes
        # stay deterministic (they are cropped by the wrapper anyway).
        xpad_ref[...] = jnp.zeros_like(xpad_ref)
        xpad_ref[:, :HW] = x_ref[0, :, :]

        # Build the [C*KH*KW, S] RHS: 9 statically-shifted windows, each a
        # [C, S] slab written at sublane offset tap*C.
        for kh in range(KH):
            for kw in range(KW):
                tap = kh * KW + kw
                off = kh * W + kw
                rhs_ref[pl.ds(tap * C, C), :] = xpad_ref[:, pl.ds(off, S)]

        # One MXU matmul: [OC, K] x [K, S] -> [OC, S], then bias broadcast.
        acc = jnp.dot(w_ref[...], rhs_ref[...],
                      preferred_element_type=jnp.float32)
        o_ref[0, :, :] = (acc + b_ref[...]).astype(o_ref.dtype)

    out = pl.pallas_call(
        kernel,
        out_shape=jax.ShapeDtypeStruct((N, OC, S), x.dtype),
        grid_spec=pltpu.PrefetchScalarGridSpec(
            num_scalar_prefetch=0,
            grid=(N,),
            in_specs=[
                pl.BlockSpec((1, C, HW), lambda n: (n, 0, 0)),
                pl.BlockSpec((OC, K), lambda n: (0, 0)),
                pl.BlockSpec((OC, 1), lambda n: (0, 0)),
            ],
            out_specs=pl.BlockSpec((1, OC, S), lambda n: (n, 0, 0)),
            scratch_shapes=[
                pltpu.VMEM((C, S_IN), jnp.float32),
                pltpu.VMEM((K, S), jnp.float32),
            ],
        ),
        compiler_params=pltpu.CompilerParams(
            dimension_semantics=("parallel",)),
    )(x_flat, w_prep, b_prep)

    # Valid outputs live at flat position oh*W + ow; single cheap crop.
    if S % W == 0:
        out_rows = out.reshape(N, OC, S // W, W)       # reshape is free here
    else:
        out_rows = out[:, :, :OH * W].reshape(N, OC, OH, W)
    return out_rows[:, :, :OH, :OW]


if __name__ == "__main__":
    # Small shapes consistent with the module's forward.
    N, C, H, W = 2, 4, 16, 16
    OC, KH, KW = 8, 3, 3

    key = jax.random.PRNGKey(0)
    kx, kw, kb = jax.random.split(key, 3)

    x = jax.random.normal(kx, (N, C, H, W), dtype=jnp.float32)
    # torch.nn.Conv2d default init convention: U(-1/sqrt(fan_in), 1/sqrt(fan_in))
    fan_in = C * KH * KW
    bound = 1.0 / (fan_in ** 0.5)
    weight = jax.random.uniform(kw, (OC, C, KH, KW), jnp.float32, -bound, bound)
    bias = jax.random.uniform(kb, (OC,), jnp.float32, -bound, bound)

    out = conv_model_forward(x, weight, bias)
    out = jax.block_until_ready(out)

    # Reference: XLA conv (NCHW, OIHW, VALID); forward = 2 * (conv + b)
    ref = jax.lax.conv_general_dilated(
        x, weight, window_strides=(1, 1), padding="VALID",
        dimension_numbers=("NCHW", "OIHW", "NCHW"))
    ref = (ref + bias.reshape(1, OC, 1, 1)) * 2.0

    assert out.shape == (N, OC, H - KH + 1, W - KW + 1)
    assert jnp.allclose(out, ref, atol=1e-4, rtol=1e-4)
    print("KERNEL_OK")
</pallas_src>

<mosaic_0001>
module attributes {stable_mosaic.version = 11 : i64} {
  func.func @kernel(%arg0: i32, %arg1: memref<1x4x256xf32, #tpu.memory_space<vmem>>, %arg2: memref<8x36xf32, #tpu.memory_space<vmem>>, %arg3: memref<8x1xf32, #tpu.memory_space<vmem>>, %arg4: memref<1x8x256xf32, #tpu.memory_space<vmem>>, %arg5: memref<4x384xf32, #tpu.memory_space<vmem>>, %arg6: memref<36x256xf32, #tpu.memory_space<vmem>>) attributes {dimension_semantics = [#tpu.dimension_semantics<parallel>], iteration_bounds = array<i64: 2>, scalar_prefetch = 0 : i64, scratch_operands = 2 : i64, tpu.core_type = #tpu.core_type<tc>, window_params = [{transform_indices = @transform_0, window_bounds = array<i64: 1, 4, 256>}, {pipeline_mode = #tpu.pipeline_mode<synchronous>, transform_indices = @transform_1, window_bounds = array<i64: 8, 36>}, {pipeline_mode = #tpu.pipeline_mode<synchronous>, transform_indices = @transform_2, window_bounds = array<i64: 8, 1>}, {transform_indices = @transform_3, window_bounds = array<i64: 1, 8, 256>}]} {
    %cst = arith.constant 0.000000e+00 : f32
    %0 = vector.broadcast %cst : f32 to vector<4x384xf32>
    %c0 = arith.constant 0 : index
    %c0_0 = arith.constant 0 : index
    %1 = vector.load %arg5[%c0, %c0_0] : memref<4x384xf32, #tpu.memory_space<vmem>>, vector<4x384xf32>
    tpu.vector_store %arg5[%c0, %c0_0], %0 {strides = array<i32>} : memref<4x384xf32, #tpu.memory_space<vmem>>, vector<4x384xf32>,
    %c0_1 = arith.constant 0 : index
    %c0_2 = arith.constant 0 : index
    %c0_3 = arith.constant 0 : index
    %2 = vector.load %arg1[%c0_1, %c0_2, %c0_3] : memref<1x4x256xf32, #tpu.memory_space<vmem>>, vector<1x4x256xf32>
    %3 = vector.shape_cast %2 : vector<1x4x256xf32> to vector<4x256xf32>
    %c0_4 = arith.constant 0 : index
    %c0_5 = arith.constant 0 : index
    %4 = vector.load %arg5[%c0_4, %c0_5] : memref<4x384xf32, #tpu.memory_space<vmem>>, vector<4x256xf32>
    tpu.vector_store %arg5[%c0_4, %c0_5], %3 {strides = array<i32>} : memref<4x384xf32, #tpu.memory_space<vmem>>, vector<4x256xf32>,
    %c0_6 = arith.constant 0 : index
    %c0_7 = arith.constant 0 : index
    %5 = vector.load %arg5[%c0_6, %c0_7] : memref<4x384xf32, #tpu.memory_space<vmem>>, vector<4x256xf32>
    %c0_8 = arith.constant 0 : index
    %c0_9 = arith.constant 0 : index
    %6 = vector.load %arg6[%c0_8, %c0_9] : memref<36x256xf32, #tpu.memory_space<vmem>>, vector<4x256xf32>
    tpu.vector_store %arg6[%c0_8, %c0_9], %5 {strides = array<i32>} : memref<36x256xf32, #tpu.memory_space<vmem>>, vector<4x256xf32>,
    %c0_10 = arith.constant 0 : index
    %c1 = arith.constant 1 : index
    %7 = vector.load %arg5[%c0_10, %c1] : memref<4x384xf32, #tpu.memory_space<vmem>>, vector<4x256xf32>
    %c4 = arith.constant 4 : index
    %c0_11 = arith.constant 0 : index
    %8 = vector.load %arg6[%c4, %c0_11] : memref<36x256xf32, #tpu.memory_space<vmem>>, vector<4x256xf32>
    tpu.vector_store %arg6[%c4, %c0_11], %7 {strides = array<i32>} : memref<36x256xf32, #tpu.memory_space<vmem>>, vector<4x256xf32>,
    %c0_12 = arith.constant 0 : index
    %c2 = arith.constant 2 : index
    %9 = vector.load %arg5[%c0_12, %c2] : memref<4x384xf32, #tpu.memory_space<vmem>>, vector<4x256xf32>
    %c8 = arith.constant 8 : index
    %c0_13 = arith.constant 0 : index
    %10 = vector.load %arg6[%c8, %c0_13] : memref<36x256xf32, #tpu.memory_space<vmem>>, vector<4x256xf32>
    tpu.vector_store %arg6[%c8, %c0_13], %9 {strides = array<i32>} : memref<36x256xf32, #tpu.memory_space<vmem>>, vector<4x256xf32>,
    %c0_14 = arith.constant 0 : index
    %c16 = arith.constant 16 : index
    %11 = vector.load %arg5[%c0_14, %c16] : memref<4x384xf32, #tpu.memory_space<vmem>>, vector<4x256xf32>
    %c12 = arith.constant 12 : index
    %c0_15 = arith.constant 0 : index
    %12 = vector.load %arg6[%c12, %c0_15] : memref<36x256xf32, #tpu.memory_space<vmem>>, vector<4x256xf32>
    tpu.vector_store %arg6[%c12, %c0_15], %11 {strides = array<i32>} : memref<36x256xf32, #tpu.memory_space<vmem>>, vector<4x256xf32>,
    %c0_16 = arith.constant 0 : index
    %c17 = arith.constant 17 : index
    %13 = vector.load %arg5[%c0_16, %c17] : memref<4x384xf32, #tpu.memory_space<vmem>>, vector<4x256xf32>
    %c16_17 = arith.constant 16 : index
    %c0_18 = arith.constant 0 : index
    %14 = vector.load %arg6[%c16_17, %c0_18] : memref<36x256xf32, #tpu.memory_space<vmem>>, vector<4x256xf32>
    tpu.vector_store %arg6[%c16_17, %c0_18], %13 {strides = array<i32>} : memref<36x256xf32, #tpu.memory_space<vmem>>, vector<4x256xf32>,
    %c0_19 = arith.constant 0 : index
    %c18 = arith.constant 18 : index
    %15 = vector.load %arg5[%c0_19, %c18] : memref<4x384xf32, #tpu.memory_space<vmem>>, vector<4x256xf32>
    %c20 = arith.constant 20 : index
    %c0_20 = arith.constant 0 : index
    %16 = vector.load %arg6[%c20, %c0_20] : memref<36x256xf32, #tpu.memory_space<vmem>>, vector<4x256xf32>
    tpu.vector_store %arg6[%c20, %c0_20], %15 {strides = array<i32>} : memref<36x256xf32, #tpu.memory_space<vmem>>, vector<4x256xf32>,
    %c0_21 = arith.constant 0 : index
    %c32 = arith.constant 32 : index
    %17 = vector.load %arg5[%c0_21, %c32] : memref<4x384xf32, #tpu.memory_space<vmem>>, vector<4x256xf32>
    %c24 = arith.constant 24 : index
    %c0_22 = arith.constant 0 : index
    %18 = vector.load %arg6[%c24, %c0_22] : memref<36x256xf32, #tpu.memory_space<vmem>>, vector<4x256xf32>
    tpu.vector_store %arg6[%c24, %c0_22], %17 {strides = array<i32>} : memref<36x256xf32, #tpu.memory_space<vmem>>, vector<4x256xf32>,
    %c0_23 = arith.constant 0 : index
    %c33 = arith.constant 33 : index
    %19 = vector.load %arg5[%c0_23, %c33] : memref<4x384xf32, #tpu.memory_space<vmem>>, vector<4x256xf32>
    %c28 = arith.constant 28 : index
    %c0_24 = arith.constant 0 : index
    %20 = vector.load %arg6[%c28, %c0_24] : memref<36x256xf32, #tpu.memory_space<vmem>>, vector<4x256xf32>
    tpu.vector_store %arg6[%c28, %c0_24], %19 {strides = array<i32>} : memref<36x256xf32, #tpu.memory_space<vmem>>, vector<4x256xf32>,
    %c0_25 = arith.constant 0 : index
    %c34 = arith.constant 34 : index
    %21 = vector.load %arg5[%c0_25, %c34] : memref<4x384xf32, #tpu.memory_space<vmem>>, vector<4x256xf32>
    %c32_26 = arith.constant 32 : index
    %c0_27 = arith.constant 0 : index
    %22 = vector.load %arg6[%c32_26, %c0_27] : memref<36x256xf32, #tpu.memory_space<vmem>>, vector<4x256xf32>
    tpu.vector_store %arg6[%c32_26, %c0_27], %21 {strides = array<i32>} : memref<36x256xf32, #tpu.memory_space<vmem>>, vector<4x256xf32>,
    %c0_28 = arith.constant 0 : index
    %c0_29 = arith.constant 0 : index
    %23 = vector.load %arg2[%c0_28, %c0_29] : memref<8x36xf32, #tpu.memory_space<vmem>>, vector<8x36xf32>
    %c0_30 = arith.constant 0 : index
    %c0_31 = arith.constant 0 : index
    %24 = vector.load %arg6[%c0_30, %c0_31] : memref<36x256xf32, #tpu.memory_space<vmem>>, vector<36x256xf32>
    %cst_32 = arith.constant dense<0.000000e+00> : vector<8x256xf32>
    %25 = tpu.matmul %23, %24, %cst_32 {dimension_numbers = #tpu.dot_dimension_numbers<[1], [0], [0], [1], [0, 0, 1, 1], [], []>} : vector<8x36xf32>, vector<36x256xf32>, vector<8x256xf32> -> vector<8x256xf32>
    %c0_33 = arith.constant 0 : index
    %c0_34 = arith.constant 0 : index
    %26 = vector.load %arg3[%c0_33, %c0_34] : memref<8x1xf32, #tpu.memory_space<vmem>>, vector<8x1xf32>
    %27 = vector.broadcast %26 : vector<8x1xf32> to vector<8x256xf32>
    %28 = arith.addf %25, %27 : vector<8x256xf32>
    %c0_35 = arith.constant 0 : index
    %c0_36 = arith.constant 0 : index
    %c0_37 = arith.constant 0 : index
    %29 = vector.load %arg4[%c0_35, %c0_36, %c0_37] : memref<1x8x256xf32, #tpu.memory_space<vmem>>, vector<1x8x256xf32>
    %30 = vector.shape_cast %29 : vector<1x8x256xf32> to vector<8x256xf32>
    %31 = vector.shape_cast %28 : vector<8x256xf32> to vector<1x8x256xf32>
    tpu.vector_store %arg4[%c0_35, %c0_36, %c0_37], %31 {strides = array<i32>} : memref<1x8x256xf32, #tpu.memory_space<vmem>>, vector<1x8x256xf32>,
    return
  }
  func.func @transform_0(%arg0: i32) -> (i32, i32, i32) {
    %c0_i32 = arith.constant 0 : i32
    %c0_i32_0 = arith.constant 0 : i32
    %c0_i32_1 = arith.constant 0 : i32
    return %arg0, %c0_i32, %c0_i32_0 : i32, i32, i32
  }
  func.func @transform_1(%arg0: i32) -> (i32, i32) {
    %c0_i32 = arith.constant 0 : i32
    %c0_i32_0 = arith.constant 0 : i32
    %c0_i32_1 = arith.constant 0 : i32
    return %c0_i32, %c0_i32_0 : i32, i32
  }
  func.func @transform_2(%arg0: i32) -> (i32, i32) {
    %c0_i32 = arith.constant 0 : i32
    %c0_i32_0 = arith.constant 0 : i32
    %c0_i32_1 = arith.constant 0 : i32
    return %c0_i32, %c0_i32_0 : i32, i32
  }
  func.func @transform_3(%arg0: i32) -> (i32, i32, i32) {
    %c0_i32 = arith.constant 0 : i32
    %c0_i32_0 = arith.constant 0 : i32
    %c0_i32_1 = arith.constant 0 : i32
    return %arg0, %c0_i32, %c0_i32_0 : i32, i32, i32
  }
}

</mosaic_0001>

<llo_original>
// kernel: tpu_custom_call.1
$region0: #{tpu_custom_call.1}
  #allocation0 [shape = 'u32[]', space=smem, size = 0x4, offset = 0x4, fixed_abs, tag = 'smem constant byte address 0x4 - core index']
  #allocation1 [shape = 'u32[144,128]{1,0:T(1,128)}', space=vmem, size = 0x12000, scoped, tag = 'internal scratch']
  #allocation2 [shape = 'f32[4,384]{1,0:T(4,128)}', space=vmem, size = 0x1800, scoped, tag = 'scratch operand']
  #allocation3 [shape = 'f32[36,256]{1,0:T(8,128)}', space=vmem, size = 0xa000, scoped, tag = 'scratch operand']
  %s0 = inlined_call_operand.hbm [shape: f32[2,4,256], index: 0, kind: input, shape index: {}]
  %s1 = inlined_call_operand.vmem [shape: f32[8,36], index: 1, kind: input, shape index: {}]
  %s2 = inlined_call_operand.vmem [shape: f32[8,1], index: 2, kind: input, shape index: {}]
  %s3 = inlined_call_operand.hbm [shape: f32[2,8,256], index: 3, kind: output, shape index: {}]
  %s4 = sld [smem:[#allocation0]]
  $region49: #{tpu_custom_call.1} parent=0
    _
  %s6 = ssub.s32 1, %s4
  %s7 = scalar_select 0, %s6, %s4
  $region1: #{tpu_custom_call.1} parent=0
    #allocation4 [shape = 'u8[8192]{0}', space=vmem, size = 0x2000, scoped, tag = 'input window, operand 0']
    #allocation5 [shape = 's32[2]{0}', space=sflag, size = 0x8, scoped, tag = 'scoped memory for tpu_custom_call.1']
    #allocation6 [shape = 's32[2]{0}', space=sflag, size = 0x8, scoped, tag = 'scoped memory for tpu_custom_call.1']
    #allocation7 [shape = 'u8[16384]{0}', space=vmem, size = 0x4000, scoped, tag = 'output window, operand 0']
    %8 = vsyncpa [#allocation5], 0
    %s9 = scalar_lea.sflag [#allocation5], 1
    %10 = vsyncpa %s9, 0
    %11 = vsyncpa [#allocation6], 0
    %s12 = scalar_lea.sflag [#allocation6], 1
    %13 = vsyncpa %s12, 0
    loop: start=0, step=1, limit=4
    $region2: #{tpu_custom_call.1} parent=1 // loop_pre_header
      _
    $region3: #{tpu_custom_call.1} parent=1 // loop_header
      %s15 = sphi 0, %s19
      %p16 = scmp.ge.s32.totalorder %s15, 4
      %s25 = sphi 0, %s27
      %s28 = sphi 0, %s25
      %s29 = sphi 0, %s28
      %s45 = sphi 0, %s29
      %s49 = sphi 0, %s49
      %s51 = sphi 0, %s49
      %s52 = sphi 0, %s51
      %s66 = sphi 0, %s52
      %s70 = sphi 0, %s70
      %s72 = sphi 0, %s70
      %s73 = sphi 0, %s72
      %s87 = sphi 0, %s73
      %s93 = sphi 0, %s95
      %s96 = sphi 0, %s93
      %s97 = sphi 0, %s96
      %s113 = sphi 0, %s97
    $region4: #{tpu_custom_call.1} parent=1 // loop_header_branch
      %18 = sbr.rel (%p16) target = $region8
    $region5: #{tpu_custom_call.1} parent=1 // loop_body
      %s20 = ssub.s32 %s15, 1
      %s21 = ssub.s32 %s15, 2
      %s22 = sadd.s32 %s15, 1
      %s23 = ssub.s32 %s15, %s22
      %p24 = scmp.eq.s32.totalorder %s23, 0
      %s26 = sadd.s32 %s25, 1
      %s27 = scalar_select %p24, %s25, %s26
      %p30 = pneg %p24
      %p31 = scmp.eq.s32.totalorder %s15, 1
      %p32 = por %p30, %p31
      %p33 = scmp.ne.s32.totalorder %s25, %s28
      %p34 = scmp.eq.s32.totalorder %s15, 0
      %p35 = por %p33, %p34
      %p36 = scmp.ne.s32.totalorder %s25, %s28
      %p37 = scmp.eq.s32.totalorder %s20, 1
      %p38 = por %p36, %p37
      %p39 = scmp.ne.s32.totalorder %s28, %s29
      %p40 = scmp.eq.s32.totalorder %s20, 0
      %p41 = por %p39, %p40
      %p42 = scmp.ne.s32.totalorder %s28, %s29
      %p43 = scmp.eq.s32.totalorder %s21, 1
      %p44 = por %p42, %p43
      %p46 = scmp.ne.s32.totalorder %s29, %s45
      %p47 = scmp.eq.s32.totalorder %s21, 0
      %p48 = por %p46, %p47
      %s50 = sadd.s32 %s49, 1
      %p53 = scmp.eq.s32.totalorder %s15, 1
      %p54 = scmp.ne.s32.totalorder %s49, %s51
      %p55 = scmp.eq.s32.totalorder %s15, 0
      %p56 = por %p54, %p55
      %p57 = scmp.ne.s32.totalorder %s49, %s51
      %p58 = scmp.eq.s32.totalorder %s20, 1
      %p59 = por %p57, %p58
      %p60 = scmp.ne.s32.totalorder %s51, %s52
      %p61 = scmp.eq.s32.totalorder %s20, 0
      %p62 = por %p60, %p61
      %p63 = scmp.ne.s32.totalorder %s51, %s52
      %p64 = scmp.eq.s32.totalorder %s21, 1
      %p65 = por %p63, %p64
      %p67 = scmp.ne.s32.totalorder %s52, %s66
      %p68 = scmp.eq.s32.totalorder %s21, 0
      %p69 = por %p67, %p68
      %s71 = sadd.s32 %s70, 1
      %p74 = scmp.eq.s32.totalorder %s15, 1
      %p75 = scmp.ne.s32.totalorder %s70, %s72
      %p76 = scmp.eq.s32.totalorder %s15, 0
      %p77 = por %p75, %p76
      %p78 = scmp.ne.s32.totalorder %s70, %s72
      %p79 = scmp.eq.s32.totalorder %s20, 1
      %p80 = por %p78, %p79
      %p81 = scmp.ne.s32.totalorder %s72, %s73
      %p82 = scmp.eq.s32.totalorder %s20, 0
      %p83 = por %p81, %p82
      %p84 = scmp.ne.s32.totalorder %s72, %s73
      %p85 = scmp.eq.s32.totalorder %s21, 1
      %p86 = por %p84, %p85
      %p88 = scmp.ne.s32.totalorder %s73, %s87
      %p89 = scmp.eq.s32.totalorder %s21, 0
      %p90 = por %p88, %p89
      %s91 = ssub.s32 %s15, %s22
      %p92 = scmp.eq.s32.totalorder %s91, 0
      %s94 = sadd.s32 %s93, 1
      %s95 = scalar_select %p92, %s93, %s94
      %p98 = pneg %p92
      %p99 = scmp.eq.s32.totalorder %s15, 1
      %p100 = por %p98, %p99
      %p101 = scmp.ne.s32.totalorder %s93, %s96
      %p102 = scmp.eq.s32.totalorder %s15, 0
      %p103 = por %p101, %p102
      %p104 = scmp.ne.s32.totalorder %s93, %s96
      %p105 = scmp.eq.s32.totalorder %s20, 1
      %p106 = por %p104, %p105
      %p107 = scmp.ne.s32.totalorder %s96, %s97
      %p108 = scmp.eq.s32.totalorder %s20, 0
      %p109 = por %p107, %p108
      %p110 = scmp.ne.s32.totalorder %s96, %s97
      %p111 = scmp.eq.s32.totalorder %s21, 1
      %p112 = por %p110, %p111
      %p114 = scmp.ne.s32.totalorder %s97, %s113
      %p115 = scmp.eq.s32.totalorder %s21, 0
      %p116 = por %p114, %p115
      %p117 = scmp.le.s32.totalorder 1, %s15
      %p118 = scmp.lt.s32.totalorder %s15, 3
      %p119 = pnand %p117, %p118
      %p120 = pneg %p119
      // Predicated region
      $region9: #{tpu_custom_call.1} parent=5 // pred_check
        _
      $region10: #{tpu_custom_call.1} parent=5 // pred_check_branch
        %122 = sbr.rel (%p119) target = $region12
      $region11: #{tpu_custom_call.1} parent=5 // pred_region
        %s123 = ssub.s32 %s15, 1
        // Predicated region
        $region13: #{tpu_custom_call.1} parent=11 // pred_check
          %p124 = pneg %p62
        $region14: #{tpu_custom_call.1} parent=11 // pred_check_branch
          %126 = sbr.rel (%p124) target = $region16
        $region15: #{tpu_custom_call.1} parent=11 // pred_region
          _
        $region16: #{tpu_custom_call.1} parent=11 // pred_fallthru
          _
        // Predicated region
        $region17: #{tpu_custom_call.1} parent=11 // pred_check
          %p127 = pneg %p83
        $region18: #{tpu_custom_call.1} parent=11 // pred_check_branch
          %129 = sbr.rel (%p127) target = $region20
        $region19: #{tpu_custom_call.1} parent=11 // pred_region
          _
        $region20: #{tpu_custom_call.1} parent=11 // pred_fallthru
          _
      $region12: #{tpu_custom_call.1} parent=5 // pred_fallthru
        _
      %p130 = scmp.lt.s32.totalorder %s15, 2
      // Predicated region
      $region21: #{tpu_custom_call.1} parent=5 // pred_check
        %p131 = pneg %p130
      $region22: #{tpu_custom_call.1} parent=5 // pred_check_branch
        %133 = sbr.rel (%p131) target = $region24
      $region23: #{tpu_custom_call.1} parent=5 // pred_region
        // Predicated region
        $region25: #{tpu_custom_call.1} parent=23 // pred_check
          %p134 = pneg %p35
        $region26: #{tpu_custom_call.1} parent=23 // pred_check_branch
          %136 = sbr.rel (%p134) target = $region28
        $region27: #{tpu_custom_call.1} parent=23 // pred_region
          %s137 = sand.u32 %s25, 1
          %s138 = scalar_lea.sflag [#allocation5], %s137
          %s139 = sand.u32 %s25, 1
          %s140 = smul.addr %s139, 8
          %s141 = scalar_lea.vmem [#allocation4], %s140
          %s143 = ssub.s32 128, 128
          %144 = vsyncadd %s138, %s143
          %s145 = smul.addr %s15, 2
          %s146 = smul.addr %s145, 64
          %s147 = scalar_lea.hbm %s0, %s146
          %s149 = sshll.u32 %s141, 4
          %s150 = int_to_ptr.vmem [resolvable:$true] %s149
          %152 = dma.hbm_to_vmem [thread:$0]  %s147, 128, %s150, %s138
        $region28: #{tpu_custom_call.1} parent=23 // pred_fallthru
          _
      $region24: #{tpu_custom_call.1} parent=5 // pred_fallthru
        _
      %p153 = scmp.le.s32.totalorder 1, %s15
      %p154 = scmp.lt.s32.totalorder %s15, 3
      %p155 = pnand %p153, %p154
      %p156 = pneg %p155
      // Predicated region
      $region29: #{tpu_custom_call.1} parent=5 // pred_check
        _
      $region30: #{tpu_custom_call.1} parent=5 // pred_check_branch
        %158 = sbr.rel (%p155) target = $region32
      $region31: #{tpu_custom_call.1} parent=5 // pred_region
        %s159 = ssub.s32 %s15, 1
        %s160 = sand.u32 %s28, 1
        %s161 = scalar_lea.sflag [#allocation5], %s160
        %s162 = sand.u32 %s28, 1
        %s163 = smul.addr %s162, 8
        %s164 = scalar_lea.vmem [#allocation4], %s163
        // Predicated region
        $region33: #{tpu_custom_call.1} parent=31 // pred_check
          %p165 = pneg %p41
        $region34: #{tpu_custom_call.1} parent=31 // pred_check_branch
          %167 = sbr.rel (%p165) target = $region36
        $region35: #{tpu_custom_call.1} parent=31 // pred_region
          %168 = dma.done %s161, 128
        $region36: #{tpu_custom_call.1} parent=31 // pred_fallthru
          _
        %s169 = sand.u32 %s28, 1
        %s170 = scalar_lea.sflag [#allocation5], %s169
        %s171 = sand.u32 %s28, 1
        %s172 = smul.addr %s171, 8
        %s173 = scalar_lea.vmem [#allocation4], %s172
        %p174 = pneg %p41
        %p175 = pneg %p38
        %p176 = pneg %p62
        %p177 = pneg %p59
        %p178 = pneg %p83
        %p179 = pneg %p80
        %p180 = pneg %p109
        %p181 = pneg %p106
        %s182 = sand.u32 %s96, 1
        %s183 = scalar_lea.sflag [#allocation6], %s182
        %s184 = sand.u32 %s96, 1
        %s185 = smul.addr %s184, 16
        %s186 = scalar_lea.vmem [#allocation7], %s185
        %187 = vst [vmem:[#allocation2] sm:$0xff] 0.0
        %188 = vst [vmem:[#allocation2 + $0x8] sm:$0xf] 0.0
        %v189 = vld [vmem:[%s164] sm:$0xff]
        %190 = vst [vmem:[#allocation2] sm:$0xff] %v189
        %v191 = vld [vmem:[#allocation2] sm:$0xff]
        %v193 = vcombine.high %v191, %v191
        %195 = vst [vmem:[#allocation3] sm:$0xf] %v191
        %196 = vst [vmem:[#allocation3 + $0x8] sm:$0xf] %v193
        %v197 = vld [vmem:[#allocation2] sm:$0xff]
        %v198 = vld [vmem:[#allocation2 + $0x8] sm:$0xf]
        %v201 = vcombine.low %v197, %v197
        %v202 = vcombine.low %v198, %v198
        %203 = vrot.lane.b32.xlu0 %v201, 127
        %v204 = vpop.permute.xlu0 %203
        %205 = vrot.lane.b32.xlu0 %v197, 127
        %v206 = vpop.permute.xlu0 %205
        %207 = vrot.lane.b32.xlu0 %v202, 127
        %v208 = vpop.permute.xlu0 %207
        %vm209 = vcmask 1039360
        %v210 = vsel %vm209, %v204, %v206
        %v211 = vsel %vm209, %v206, %v208
        %214 = vst [vmem:[#allocation3] sm:$0xf0] %v210
        %215 = vst [vmem:[#allocation3 + $0x8] sm:$0xf0] %v211
        %v216 = vld [vmem:[#allocation2] sm:$0xff]
        %v217 = vld [vmem:[#allocation2 + $0x8] sm:$0xf]
        %v220 = vcombine.high %v216, %v216
        %221 = vrot.lane.b32.xlu0 %v216, 126
        %v222 = vpop.permute.xlu0 %221
        %223 = vrot.lane.b32.xlu0 %v220, 126
        %v224 = vpop.permute.xlu0 %223
        %225 = vrot.lane.b32.xlu0 %v217, 126
        %v226 = vpop.permute.xlu0 %225
        %vm227 = vcmask 1031168
        %v228 = vsel %vm227, %v222, %v224
        %v229 = vsel %vm227, %v224, %v226
        %232 = vst [vmem:[#allocation3 + $0x10] sm:$0xf] %v228
        %233 = vst [vmem:[#allocation3 + $0x18] sm:$0xf] %v229
        %v234 = vld [vmem:[#allocation2] sm:$0xff]
        %v235 = vld [vmem:[#allocation2 + $0x8] sm:$0xf]
        %v238 = vcombine.low %v234, %v234
        %v239 = vcombine.low %v235, %v235
        %240 = vrot.lane.b32.xlu0 %v238, 112
        %v241 = vpop.permute.xlu0 %240
        %242 = vrot.lane.b32.xlu0 %v234, 112
        %v243 = vpop.permute.xlu0 %242
        %244 = vrot.lane.b32.xlu0 %v239, 112
        %v245 = vpop.permute.xlu0 %244
        %vm246 = vcmask 916480
        %v247 = vsel %vm246, %v241, %v243
        %v248 = vsel %vm246, %v243, %v245
        %251 = vst [vmem:[#allocation3 + $0x10] sm:$0xf0] %v247
        %252 = vst [vmem:[#allocation3 + $0x18] sm:$0xf0] %v248
        %v253 = vld [vmem:[#allocation2] sm:$0xff]
        %v254 = vld [vmem:[#allocation2 + $0x8] sm:$0xf]
        %v257 = vcombine.high %v253, %v253
        %258 = vrot.lane.b32.xlu0 %v253, 111
        %v259 = vpop.permute.xlu0 %258
        %260 = vrot.lane.b32.xlu0 %v257, 111
        %v261 = vpop.permute.xlu0 %260
        %262 = vrot.lane.b32.xlu0 %v254, 111
        %v263 = vpop.permute.xlu0 %262
        %vm264 = vcmask 908288
        %v265 = vsel %vm264, %v259, %v261
        %v266 = vsel %vm264, %v261, %v263
        %269 = vst [vmem:[#allocation3 + $0x20] sm:$0xf] %v265
        %270 = vst [vmem:[#allocation3 + $0x28] sm:$0xf] %v266
        %v271 = vld [vmem:[#allocation2] sm:$0xff]
        %v272 = vld [vmem:[#allocation2 + $0x8] sm:$0xf]
        %v275 = vcombine.low %v271, %v271
        %v276 = vcombine.low %v272, %v272
        %277 = vrot.lane.b32.xlu0 %v275, 110
        %v278 = vpop.permute.xlu0 %277
        %279 = vrot.lane.b32.xlu0 %v271, 110
        %v280 = vpop.permute.xlu0 %279
        %281 = vrot.lane.b32.xlu0 %v276, 110
        %v282 = vpop.permute.xlu0 %281
        %vm283 = vcmask 900096
        %v284 = vsel %vm283, %v278, %v280
        %v285 = vsel %vm283, %v280, %v282
        %288 = vst [vmem:[#allocation3 + $0x20] sm:$0xf0] %v284
        %289 = vst [vmem:[#allocation3 + $0x28] sm:$0xf0] %v285
        %v290 = vld [vmem:[#allocation2] sm:$0xff]
        %v291 = vld [vmem:[#allocation2 + $0x8] sm:$0xf]
        %v294 = vcombine.high %v290, %v290
        %295 = vrot.lane.b32.xlu0 %v290, 96
        %v296 = vpop.permute.xlu0 %295
        %297 = vrot.lane.b32.xlu0 %v294, 96
        %v298 = vpop.permute.xlu0 %297
        %299 = vrot.lane.b32.xlu0 %v291, 96
        %v300 = vpop.permute.xlu0 %299
        %vm301 = vcmask 785408
        %v302 = vsel %vm301, %v296, %v298
        %v303 = vsel %vm301, %v298, %v300
        %306 = vst [vmem:[#allocation3 + $0x30] sm:$0xf] %v302
        %307 = vst [vmem:[#allocation3 + $0x38] sm:$0xf] %v303
        %v308 = vld [vmem:[#allocation2] sm:$0xff]
        %v309 = vld [vmem:[#allocation2 + $0x8] sm:$0xf]
        %v312 = vcombine.low %v308, %v308
        %v313 = vcombine.low %v309, %v309
        %314 = vrot.lane.b32.xlu0 %v312, 95
        %v315 = vpop.permute.xlu0 %314
        %316 = vrot.lane.b32.xlu0 %v308, 95
        %v317 = vpop.permute.xlu0 %316
        %318 = vrot.lane.b32.xlu0 %v313, 95
        %v319 = vpop.permute.xlu0 %318
        %vm320 = vcmask 777216
        %v321 = vsel %vm320, %v315, %v317
        %v322 = vsel %vm320, %v317, %v319
        %325 = vst [vmem:[#allocation3 + $0x30] sm:$0xf0] %v321
        %326 = vst [vmem:[#allocation3 + $0x38] sm:$0xf0] %v322
        %v327 = vld [vmem:[#allocation2] sm:$0xff]
        %v328 = vld [vmem:[#allocation2 + $0x8] sm:$0xf]
        %v331 = vcombine.high %v327, %v327
        %332 = vrot.lane.b32.xlu0 %v327, 94
        %v333 = vpop.permute.xlu0 %332
        %334 = vrot.lane.b32.xlu0 %v331, 94
        %v335 = vpop.permute.xlu0 %334
        %336 = vrot.lane.b32.xlu0 %v328, 94
        %v337 = vpop.permute.xlu0 %336
        %vm338 = vcmask 769024
        %v339 = vsel %vm338, %v333, %v335
        %v340 = vsel %vm338, %v335, %v337
        %343 = vst [vmem:[#allocation3 + $0x40] sm:$0xf] %v339
        %344 = vst [vmem:[#allocation3 + $0x48] sm:$0xf] %v340
        %v345 = vld [vmem:[%s1] sm:$0xff]
        %v346 = vld [vmem:[#allocation3] sm:$0xff]
        %v347 = vld [vmem:[#allocation3 + $0x8] sm:$0xff]
        %v348 = vld [vmem:[#allocation3 + $0x10] sm:$0xff]
        %v349 = vld [vmem:[#allocation3 + $0x18] sm:$0xff]
        %v350 = vld [vmem:[#allocation3 + $0x20] sm:$0xff]
        %v351 = vld [vmem:[#allocation3 + $0x28] sm:$0xff]
        %v352 = vld [vmem:[#allocation3 + $0x30] sm:$0xff]
        %v353 = vld [vmem:[#allocation3 + $0x38] sm:$0xff]
        %v354 = vld [vmem:[#allocation3 + $0x40] sm:$0xf]
        %v355 = vld [vmem:[#allocation3 + $0x48] sm:$0xf]
        %v356 = vld [vmem:[%s2] sm:$0xff]
        %358 = vset.pattern.permute.xlu0 0
        %359 = vperm.xlu0 %358, %v356
        %v360 = vpop.permute.xlu0 %359
        %vm362 = vcmask 293888
        %v364 = vsel %vm362, %v345, 0
        %vm366 = vcmask 1043456
        %v368 = vsel %vm366, %v354, 0
        %v371 = vsel %vm366, %v355, 0
        %373 = vmatprep.subr.mxu0 0.0
        %374 = vmatpush1.msra.mxu0 0.0
        %375 = vmatprep.subr.mxu0 0.0
        %376 = vmatpush1.msra.mxu0 0.0
        %377 = vmatprep.subr.mxu0 0.0
        %378 = vmatpush1.msra.mxu0 0.0
        %379 = vmatprep.subr.mxu0 0.0
        %380 = vmatpush1.msra.mxu0 0.0
        %381 = vmatprep.subr.mxu0 0.0
        %382 = vmatpush1.msra.mxu0 0.0
        %383 = vmatprep.subr.mxu0 0.0
        %384 = vmatpush1.msra.mxu0 0.0
        %385 = vmatprep.subr.mxu0 0.0
        %386 = vmatpush1.msra.mxu0 0.0
        %387 = vmatprep.subr.mxu0 0.0
        %388 = vmatpush1.msra.mxu0 0.0
        %389 = vmatprep.subr.mxu0 0.0
        %390 = vmatpush1.msra.mxu0 0.0
        %391 = vmatprep.subr.mxu0 0.0
        %392 = vmatpush1.msra.mxu0 0.0
        %393 = vmatprep.subr.mxu0 0.0
        %394 = vmatpush1.msra.mxu0 0.0
        %395 = vmatprep.subr.mxu0 %v371
        %396 = vmatpush1.msra.mxu0 %v368
        %397 = vmatprep.subr.mxu0 %v353
        %398 = vmatpush1.msra.mxu0 %v352
        %399 = vmatprep.subr.mxu0 %v351
        %400 = vmatpush1.msra.mxu0 %v350
        %401 = vmatprep.subr.mxu0 %v349
        %402 = vmatpush1.msra.mxu0 %v348
        %403 = vmatprep.subr.mxu0 %v347
        %404 = vmatpush1.msra.mxu0 %v346
        %405 = vmatprep.subr.mxu0 0.0
        %406 = vmatpush2.msra.mxu0 0.0
        %407 = vmatprep.subr.mxu0 0.0
        %408 = vmatpush2.msra.mxu0 0.0
        %409 = vmatprep.subr.mxu0 0.0
        %410 = vmatpush2.msra.mxu0 0.0
        %411 = vmatprep.subr.mxu0 0.0
        %412 = vmatpush2.msra.mxu0 0.0
        %413 = vmatprep.subr.mxu0 0.0
        %414 = vmatpush2.msra.mxu0 0.0
        %415 = vmatprep.subr.mxu0 0.0
        %416 = vmatpush2.msra.mxu0 0.0
        %417 = vmatprep.subr.mxu0 0.0
        %418 = vmatpush2.msra.mxu0 0.0
        %419 = vmatprep.subr.mxu0 0.0
        %420 = vmatpush2.msra.mxu0 0.0
        %421 = vmatprep.subr.mxu0 0.0
        %422 = vmatpush2.msra.mxu0 0.0
        %423 = vmatprep.subr.mxu0 0.0
        %424 = vmatpush2.msra.mxu0 0.0
        %425 = vmatprep.subr.mxu0 0.0
        %426 = vmatpush2.msra.mxu0 0.0
        %427 = vmatprep.subr.mxu0 0.0
        %428 = vmatpush2.msra.mxu0 0.0
        %429 = vmatprep.subr.mxu0 0.0
        %430 = vmatpush2.msra.mxu0 0.0
        %431 = vmatprep.subr.mxu0 0.0
        %432 = vmatpush2.msra.mxu0 0.0
        %433 = vmatprep.subr.mxu0 0.0
        %434 = vmatpush2.msra.mxu0 0.0
        %435 = vmatprep.subr.mxu0 0.0
        %436 = vmatpush2.msra.mxu0 0.0
        %437 = vmatprep.mubr.f32.mxu0 0.0
        %438 = vmatmul.mubr.f32.gmra.mxu0 %v364
        %v439 = vpop.f32.mrf.mxu0
        %v440 = vadd.f32 %v360, %v439
        %v441 = vpop.f32.mrf.mxu0
        %v442 = vadd.f32 %v360, %v441
        %443 = vdwg.mxu0
        %444 = vst [vmem:[%s186] sm:$0xff] %v440
        %445 = vst [vmem:[%s186 + $0x8] sm:$0xff] %v442
        %s446 = sand.u32 %s96, 1
        %s447 = scalar_lea.sflag [#allocation6], %s446
        %s448 = sand.u32 %s96, 1
        %s449 = smul.addr %s448, 16
        %s450 = scalar_lea.vmem [#allocation7], %s449
        // Predicated region
        $region37: #{tpu_custom_call.1} parent=31 // pred_check
          %p451 = pneg %p106
        $region38: #{tpu_custom_call.1} parent=31 // pred_check_branch
          %453 = sbr.rel (%p451) target = $region40
        $region39: #{tpu_custom_call.1} parent=31 // pred_region
          %s455 = ssub.s32 256, 256
          %456 = vsyncadd %s447, %s455
          %s457 = smul.addr %s20, 2
          %s458 = smul.addr %s457, 128
          %s459 = scalar_lea.hbm %s3, %s458
          %s461 = sshll.u32 %s450, 4
          %s462 = int_to_ptr.vmem [resolvable:$true] %s461
          %464 = dma.vmem_to_hbm [thread:$0]  %s462, 256, %s459, %s447
        $region40: #{tpu_custom_call.1} parent=31 // pred_fallthru
          _
      $region32: #{tpu_custom_call.1} parent=5 // pred_fallthru
        _
      %p465 = scmp.le.s32.totalorder 2, %s15
      // Predicated region
      $region41: #{tpu_custom_call.1} parent=5 // pred_check
        %p466 = pneg %p465
      $region42: #{tpu_custom_call.1} parent=5 // pred_check_branch
        %468 = sbr.rel (%p466) target = $region44
      $region43: #{tpu_custom_call.1} parent=5 // pred_region
        %s469 = ssub.s32 %s15, 2
        // Predicated region
        $region45: #{tpu_custom_call.1} parent=43 // pred_check
          %p470 = pneg %p112
        $region46: #{tpu_custom_call.1} parent=43 // pred_check_branch
          %472 = sbr.rel (%p470) target = $region48
        $region47: #{tpu_custom_call.1} parent=43 // pred_region
          %s473 = sand.u32 %s97, 1
          %s474 = scalar_lea.sflag [#allocation6], %s473
          %s475 = sand.u32 %s97, 1
          %s476 = smul.addr %s475, 16
          %s477 = scalar_lea.vmem [#allocation7], %s476
          %478 = dma.done %s474, 256
        $region48: #{tpu_custom_call.1} parent=43 // pred_fallthru
          _
      $region44: #{tpu_custom_call.1} parent=5 // pred_fallthru
        _
    $region6: #{tpu_custom_call.1} parent=1 // loop_footer
      %s19 = sadd.s32 1, %s15
    $region7: #{tpu_custom_call.1} parent=1 // loop_footer_branch
      %14 = sbr.rel target = $region3
    $region8: #{tpu_custom_call.1} parent=1 // loop_exit
      _
    %479 = vsyncpa [#allocation5], 1
    %s480 = scalar_lea.sflag [#allocation5], 1
    %481 = vsyncpa %s480, 1
    %482 = vsyncpa [#allocation6], 1
    %s483 = scalar_lea.sflag [#allocation6], 1
    %484 = vsyncpa %s483, 1

</llo_original>
